<compile_context>
chip_gen: v5e
topology: v5e:2x2
jax: 0.10.0
libtpu: 0.0.40
codegen_flags: <defaults>
</compile_context>

<pallas_src>
import functools

import jax
import jax.numpy as jnp
from jax.experimental import pallas as pl
from jax.experimental.pallas import tpu as pltpu

_LANES = 128
_SUBLANES = 8


def _round_up(x, m):
    return ((x + m - 1) // m) * m


def _dice_counts_kernel(x_ref, t_ref, out_ref, inter_acc, tp_acc, *, eps):
    # x_ref:     (C, TR, 128)  logits tile for one batch element (input dtype)
    # t_ref:     (TR, 128)     int32 label tile
    # out_ref:   (C-1, 1)      per-class dice for this batch (written on last tile)
    # inter_acc: (C-1, 128)    f32 scratch: per-lane partial intersection counts
    # tp_acc:    (C-1, 128)    f32 scratch: per-lane partial |T==c| + |P==c| counts
    C = x_ref.shape[0]
    n = pl.program_id(1)

    @pl.when(n == 0)
    def _init():
        inter_acc[...] = jnp.zeros_like(inter_acc)
        tp_acc[...] = jnp.zeros_like(tp_acc)

    t = t_ref[...]                                     # (TR, 128) int32

    # argmax over the class axis, first-occurrence tie-break (== torch.max(dim=1)).
    # TODO(synk): for large C (tens of classes) convert these unrolled class loops
    # to lax.fori_loop with x_ref[pl.ds(c, 1)] to limit code size / vreg pressure.
    best_val = x_ref[0]                                # (TR, 128), input dtype
    best_idx = jnp.zeros(best_val.shape, jnp.int32)
    for c in range(1, C):
        v = x_ref[c]
        better = v > best_val
        best_val = jnp.where(better, v, best_val)
        best_idx = jnp.where(better, jnp.int32(c), best_idx)

    # Per foreground class: accumulate intersection and |T==c| + |P==c| counts.
    # Only reduce over the sublane (row) axis per tile; the final lane reduction
    # is deferred to the finalize step.  Counts are exact in f32 (integer-valued,
    # well below 2^24 per class for realistic image sizes).
    for c in range(1, C):
        tif = (t == c).astype(jnp.float32)             # (TR, 128)
        pif = (best_idx == c).astype(jnp.float32)      # (TR, 128)
        inter_p = jnp.sum(tif * pif, axis=0, keepdims=True)   # (1, 128)
        tp_p = jnp.sum(tif + pif, axis=0, keepdims=True)      # (1, 128)
        inter_acc[c - 1:c, :] += inter_p
        tp_acc[c - 1:c, :] += tp_p

    @pl.when(n == pl.num_programs(1) - 1)
    def _finalize():
        inter = jnp.sum(inter_acc[...], axis=-1, keepdims=True)   # (C-1, 1)
        tp = jnp.sum(tp_acc[...], axis=-1, keepdims=True)         # (C-1, 1)
        union = tp - inter                    # |T ∪ P| = |T| + |P| - |T ∩ P|
        out_ref[...] = (inter + eps) / (union + eps)


def dice_loss11(x, target, eps=1e-8, *, max_tile_rows=1024,
                block_vmem_budget=8 * 1024 * 1024):
    """x: (B, C, H, W) logits (f32 or bf16, kept as-is); target: (B, H, W) int labels."""
    B, C, H, W = x.shape
    assert C >= 2, "DiceLoss11 needs at least one foreground class"
    N = H * W

    # Pixel axis laid out as (rows, 128) lanes.
    rows = _round_up(N, _LANES) // _LANES

    # Tile rows: double-buffered (logits + labels) tiles must fit the block budget.
    bytes_per_row = _LANES * (C * x.dtype.itemsize + 4)
    tile_rows = max(_SUBLANES,
                    min(max_tile_rows, block_vmem_budget // (2 * bytes_per_row)))
    tile_rows = (tile_rows // _SUBLANES) * _SUBLANES
    tile_rows = min(tile_rows, _round_up(rows, _SUBLANES))

    rows_pad = _round_up(rows, tile_rows)
    n_pad = rows_pad * _LANES

    x3 = x.reshape(B, C, N)                      # keep logits dtype (no f32 upcast)
    t2 = target.reshape(B, N).astype(jnp.int32)
    if n_pad != N:
        # Padded pixels: all-zero logits -> argmax == 0 (first occurrence) and
        # label 0, so they never contribute to any foreground class count.
        x3 = jnp.pad(x3, ((0, 0), (0, 0), (0, n_pad - N)))
        t2 = jnp.pad(t2, ((0, 0), (0, n_pad - N)))
    x4 = x3.reshape(B, C, rows_pad, _LANES)
    t3 = t2.reshape(B, rows_pad, _LANES)

    num_tiles = rows_pad // tile_rows
    kernel = functools.partial(_dice_counts_kernel, eps=float(eps))

    dice = pl.pallas_call(
        kernel,
        out_shape=jax.ShapeDtypeStruct((B, C - 1, 1), jnp.float32),
        grid_spec=pltpu.PrefetchScalarGridSpec(
            num_scalar_prefetch=0,
            grid=(B, num_tiles),
            in_specs=[
                pl.BlockSpec((None, C, tile_rows, _LANES), lambda b, n: (b, 0, n, 0)),
                pl.BlockSpec((None, tile_rows, _LANES), lambda b, n: (b, n, 0)),
            ],
            out_specs=pl.BlockSpec((None, C - 1, 1), lambda b, n: (b, 0, 0)),
            scratch_shapes=[
                pltpu.VMEM((C - 1, _LANES), jnp.float32),
                pltpu.VMEM((C - 1, _LANES), jnp.float32),
            ],
        ),
        compiler_params=pltpu.CompilerParams(
            dimension_semantics=("parallel", "arbitrary"),
            vmem_limit_bytes=32 * 1024 * 1024,
        ),
    )(x4, t3)

    # Tiny finalization (mean over B*(C-1) values) stays in the wrapper so the
    # batch axis can be megacore-parallel inside the kernel.
    return 1.0 - jnp.mean(dice[:, :, 0])


def _reference_dice_loss(x, target, eps=1e-8):
    # Pure-JAX reference of the PyTorch forward, for a correctness check.
    B, C = x.shape[0], x.shape[1]
    pred = jnp.argmax(x, axis=1).reshape(B, -1)
    tgt = target.reshape(B, -1)
    cols = []
    for c in range(1, C):
        ti = tgt == c
        pi = pred == c
        inter = jnp.sum(jnp.logical_and(ti, pi), axis=-1).astype(jnp.float32)
        union = jnp.sum(jnp.logical_or(ti, pi), axis=-1).astype(jnp.float32)
        cols.append((inter + eps) / (union + eps))
    dice = jnp.stack(cols, axis=1)               # (B, C-1)
    return 1.0 - dice.mean()


if __name__ == "__main__":
    key = jax.random.PRNGKey(0)
    kx, kt = jax.random.split(key)

    B, C, H, W = 2, 4, 16, 16
    x = jax.random.normal(kx, (B, C, H, W), dtype=jnp.float32)
    target = jax.random.randint(kt, (B, H, W), 0, C, dtype=jnp.int32)

    loss = dice_loss11(x, target)
    loss = jax.block_until_ready(loss)

    ref = jax.block_until_ready(_reference_dice_loss(x, target))
    assert jnp.allclose(loss, ref, atol=1e-6), (loss, ref)

    print("KERNEL_OK")
</pallas_src>

<mosaic_0001>
module attributes {stable_mosaic.version = 11 : i64} {
  func.func @_dice_counts_kernel(%arg0: i32, %arg1: i32, %arg2: memref<1x4x8x128xf32, #tpu.memory_space<vmem>>, %arg3: memref<1x8x128xi32, #tpu.memory_space<vmem>>, %arg4: memref<1x3x1xf32, #tpu.memory_space<vmem>>, %arg5: memref<3x128xf32, #tpu.memory_space<vmem>>, %arg6: memref<3x128xf32, #tpu.memory_space<vmem>>) attributes {dimension_semantics = [#tpu.dimension_semantics<parallel>, #tpu.dimension_semantics<arbitrary>], iteration_bounds = array<i64: 2, 1>, scalar_prefetch = 0 : i64, scratch_operands = 2 : i64, tpu.core_type = #tpu.core_type<tc>, window_params = [{transform_indices = @transform_0, window_bounds = array<i64: 1, 4, 8, 128>}, {transform_indices = @transform_1, window_bounds = array<i64: 1, 8, 128>}, {transform_indices = @transform_2, window_bounds = array<i64: 1, 3, 1>}]} {
    %c0_i32 = arith.constant 0 : i32
    %0 = arith.cmpi eq, %arg1, %c0_i32 : i32
    %1 = arith.extui %0 : i1 to i32
    %c0_i32_0 = arith.constant 0 : i32
    %2 = arith.cmpi ne, %1, %c0_i32_0 : i32
    scf.if %2 {
      %cst_54 = arith.constant 0.000000e+00 : f32
      %88 = vector.broadcast %cst_54 : f32 to vector<3x128xf32>
      %c0_55 = arith.constant 0 : index
      %c0_56 = arith.constant 0 : index
      %89 = vector.load %arg5[%c0_55, %c0_56] : memref<3x128xf32, #tpu.memory_space<vmem>>, vector<3x128xf32>
      tpu.vector_store %arg5[%c0_55, %c0_56], %88 {strides = array<i32>} : memref<3x128xf32, #tpu.memory_space<vmem>>, vector<3x128xf32>,
      %cst_57 = arith.constant 0.000000e+00 : f32
      %90 = vector.broadcast %cst_57 : f32 to vector<3x128xf32>
      %c0_58 = arith.constant 0 : index
      %c0_59 = arith.constant 0 : index
      %91 = vector.load %arg6[%c0_58, %c0_59] : memref<3x128xf32, #tpu.memory_space<vmem>>, vector<3x128xf32>
      tpu.vector_store %arg6[%c0_58, %c0_59], %90 {strides = array<i32>} : memref<3x128xf32, #tpu.memory_space<vmem>>, vector<3x128xf32>,
    } else {
    }
    %c0 = arith.constant 0 : index
    %c0_1 = arith.constant 0 : index
    %c0_2 = arith.constant 0 : index
    %3 = vector.load %arg3[%c0, %c0_1, %c0_2] : memref<1x8x128xi32, #tpu.memory_space<vmem>>, vector<1x8x128xi32>
    %4 = vector.shape_cast %3 : vector<1x8x128xi32> to vector<8x128xi32>
    %c0_3 = arith.constant 0 : index
    %c0_4 = arith.constant 0 : index
    %c0_5 = arith.constant 0 : index
    %c0_6 = arith.constant 0 : index
    %5 = vector.load %arg2[%c0_3, %c0_4, %c0_5, %c0_6] : memref<1x4x8x128xf32, #tpu.memory_space<vmem>>, vector<1x1x8x128xf32>
    %6 = vector.shape_cast %5 : vector<1x1x8x128xf32> to vector<8x128xf32>
    %c0_i32_7 = arith.constant 0 : i32
    %7 = vector.broadcast %c0_i32_7 : i32 to vector<8x128xi32>
    %c0_8 = arith.constant 0 : index
    %c1 = arith.constant 1 : index
    %c0_9 = arith.constant 0 : index
    %c0_10 = arith.constant 0 : index
    %8 = vector.load %arg2[%c0_8, %c1, %c0_9, %c0_10] : memref<1x4x8x128xf32, #tpu.memory_space<vmem>>, vector<1x1x8x128xf32>
    %9 = vector.shape_cast %8 : vector<1x1x8x128xf32> to vector<8x128xf32>
    %10 = arith.cmpf ogt, %9, %6 : vector<8x128xf32>
    %11 = arith.select %10, %9, %6 : vector<8x128xi1>, vector<8x128xf32>
    %c1_i32 = arith.constant 1 : i32
    %12 = vector.broadcast %c1_i32 : i32 to vector<8x128xi32>
    %13 = arith.select %10, %12, %7 : vector<8x128xi1>, vector<8x128xi32>
    %c0_11 = arith.constant 0 : index
    %c2 = arith.constant 2 : index
    %c0_12 = arith.constant 0 : index
    %c0_13 = arith.constant 0 : index
    %14 = vector.load %arg2[%c0_11, %c2, %c0_12, %c0_13] : memref<1x4x8x128xf32, #tpu.memory_space<vmem>>, vector<1x1x8x128xf32>
    %15 = vector.shape_cast %14 : vector<1x1x8x128xf32> to vector<8x128xf32>
    %16 = arith.cmpf ogt, %15, %11 : vector<8x128xf32>
    %17 = arith.select %16, %15, %11 : vector<8x128xi1>, vector<8x128xf32>
    %c2_i32 = arith.constant 2 : i32
    %18 = vector.broadcast %c2_i32 : i32 to vector<8x128xi32>
    %19 = arith.select %16, %18, %13 : vector<8x128xi1>, vector<8x128xi32>
    %c0_14 = arith.constant 0 : index
    %c3 = arith.constant 3 : index
    %c0_15 = arith.constant 0 : index
    %c0_16 = arith.constant 0 : index
    %20 = vector.load %arg2[%c0_14, %c3, %c0_15, %c0_16] : memref<1x4x8x128xf32, #tpu.memory_space<vmem>>, vector<1x1x8x128xf32>
    %21 = vector.shape_cast %20 : vector<1x1x8x128xf32> to vector<8x128xf32>
    %22 = arith.cmpf ogt, %21, %17 : vector<8x128xf32>
    %c3_i32 = arith.constant 3 : i32
    %23 = vector.broadcast %c3_i32 : i32 to vector<8x128xi32>
    %24 = arith.select %22, %23, %19 : vector<8x128xi1>, vector<8x128xi32>
    %c1_i32_17 = arith.constant 1 : i32
    %25 = vector.broadcast %c1_i32_17 : i32 to vector<8x128xi32>
    %26 = arith.cmpi eq, %4, %25 : vector<8x128xi32>
    %27 = arith.extui %26 : vector<8x128xi1> to vector<8x128xi32>
    %28 = arith.sitofp %27 : vector<8x128xi32> to vector<8x128xf32>
    %c1_i32_18 = arith.constant 1 : i32
    %29 = vector.broadcast %c1_i32_18 : i32 to vector<8x128xi32>
    %30 = arith.cmpi eq, %24, %29 : vector<8x128xi32>
    %31 = arith.extui %30 : vector<8x128xi1> to vector<8x128xi32>
    %32 = arith.sitofp %31 : vector<8x128xi32> to vector<8x128xf32>
    %33 = arith.mulf %28, %32 : vector<8x128xf32>
    %cst = arith.constant dense<0.000000e+00> : vector<128xf32>
    %34 = vector.multi_reduction <add>, %33, %cst [0] : vector<8x128xf32> to vector<128xf32>
    %35 = vector.shape_cast %34 : vector<128xf32> to vector<1x128xf32>
    %36 = arith.addf %28, %32 : vector<8x128xf32>
    %cst_19 = arith.constant dense<0.000000e+00> : vector<128xf32>
    %37 = vector.multi_reduction <add>, %36, %cst_19 [0] : vector<8x128xf32> to vector<128xf32>
    %38 = vector.shape_cast %37 : vector<128xf32> to vector<1x128xf32>
    %c0_20 = arith.constant 0 : index
    %c0_21 = arith.constant 0 : index
    %39 = vector.load %arg5[%c0_20, %c0_21] : memref<3x128xf32, #tpu.memory_space<vmem>>, vector<1x128xf32>
    %40 = arith.addf %39, %35 : vector<1x128xf32>
    %c0_22 = arith.constant 0 : index
    %c0_23 = arith.constant 0 : index
    %41 = vector.load %arg5[%c0_22, %c0_23] : memref<3x128xf32, #tpu.memory_space<vmem>>, vector<1x128xf32>
    tpu.vector_store %arg5[%c0_22, %c0_23], %40 {strides = array<i32>} : memref<3x128xf32, #tpu.memory_space<vmem>>, vector<1x128xf32>,
    %c0_24 = arith.constant 0 : index
    %c0_25 = arith.constant 0 : index
    %42 = vector.load %arg6[%c0_24, %c0_25] : memref<3x128xf32, #tpu.memory_space<vmem>>, vector<1x128xf32>
    %43 = arith.addf %42, %38 : vector<1x128xf32>
    %c0_26 = arith.constant 0 : index
    %c0_27 = arith.constant 0 : index
    %44 = vector.load %arg6[%c0_26, %c0_27] : memref<3x128xf32, #tpu.memory_space<vmem>>, vector<1x128xf32>
    tpu.vector_store %arg6[%c0_26, %c0_27], %43 {strides = array<i32>} : memref<3x128xf32, #tpu.memory_space<vmem>>, vector<1x128xf32>,
    %c2_i32_28 = arith.constant 2 : i32
    %45 = vector.broadcast %c2_i32_28 : i32 to vector<8x128xi32>
    %46 = arith.cmpi eq, %4, %45 : vector<8x128xi32>
    %47 = arith.extui %46 : vector<8x128xi1> to vector<8x128xi32>
    %48 = arith.sitofp %47 : vector<8x128xi32> to vector<8x128xf32>
    %c2_i32_29 = arith.constant 2 : i32
    %49 = vector.broadcast %c2_i32_29 : i32 to vector<8x128xi32>
    %50 = arith.cmpi eq, %24, %49 : vector<8x128xi32>
    %51 = arith.extui %50 : vector<8x128xi1> to vector<8x128xi32>
    %52 = arith.sitofp %51 : vector<8x128xi32> to vector<8x128xf32>
    %53 = arith.mulf %48, %52 : vector<8x128xf32>
    %cst_30 = arith.constant dense<0.000000e+00> : vector<128xf32>
    %54 = vector.multi_reduction <add>, %53, %cst_30 [0] : vector<8x128xf32> to vector<128xf32>
    %55 = vector.shape_cast %54 : vector<128xf32> to vector<1x128xf32>
    %56 = arith.addf %48, %52 : vector<8x128xf32>
    %cst_31 = arith.constant dense<0.000000e+00> : vector<128xf32>
    %57 = vector.multi_reduction <add>, %56, %cst_31 [0] : vector<8x128xf32> to vector<128xf32>
    %58 = vector.shape_cast %57 : vector<128xf32> to vector<1x128xf32>
    %c1_32 = arith.constant 1 : index
    %c0_33 = arith.constant 0 : index
    %59 = vector.load %arg5[%c1_32, %c0_33] : memref<3x128xf32, #tpu.memory_space<vmem>>, vector<1x128xf32>
    %60 = arith.addf %59, %55 : vector<1x128xf32>
    %c1_34 = arith.constant 1 : index
    %c0_35 = arith.constant 0 : index
    %61 = vector.load %arg5[%c1_34, %c0_35] : memref<3x128xf32, #tpu.memory_space<vmem>>, vector<1x128xf32>
    tpu.vector_store %arg5[%c1_34, %c0_35], %60 {strides = array<i32>} : memref<3x128xf32, #tpu.memory_space<vmem>>, vector<1x128xf32>,
    %c1_36 = arith.constant 1 : index
    %c0_37 = arith.constant 0 : index
    %62 = vector.load %arg6[%c1_36, %c0_37] : memref<3x128xf32, #tpu.memory_space<vmem>>, vector<1x128xf32>
    %63 = arith.addf %62, %58 : vector<1x128xf32>
    %c1_38 = arith.constant 1 : index
    %c0_39 = arith.constant 0 : index
    %64 = vector.load %arg6[%c1_38, %c0_39] : memref<3x128xf32, #tpu.memory_space<vmem>>, vector<1x128xf32>
    tpu.vector_store %arg6[%c1_38, %c0_39], %63 {strides = array<i32>} : memref<3x128xf32, #tpu.memory_space<vmem>>, vector<1x128xf32>,
    %c3_i32_40 = arith.constant 3 : i32
    %65 = vector.broadcast %c3_i32_40 : i32 to vector<8x128xi32>
    %66 = arith.cmpi eq, %4, %65 : vector<8x128xi32>
    %67 = arith.extui %66 : vector<8x128xi1> to vector<8x128xi32>
    %68 = arith.sitofp %67 : vector<8x128xi32> to vector<8x128xf32>
    %c3_i32_41 = arith.constant 3 : i32
    %69 = vector.broadcast %c3_i32_41 : i32 to vector<8x128xi32>
    %70 = arith.cmpi eq, %24, %69 : vector<8x128xi32>
    %71 = arith.extui %70 : vector<8x128xi1> to vector<8x128xi32>
    %72 = arith.sitofp %71 : vector<8x128xi32> to vector<8x128xf32>
    %73 = arith.mulf %68, %72 : vector<8x128xf32>
    %cst_42 = arith.constant dense<0.000000e+00> : vector<128xf32>
    %74 = vector.multi_reduction <add>, %73, %cst_42 [0] : vector<8x128xf32> to vector<128xf32>
    %75 = vector.shape_cast %74 : vector<128xf32> to vector<1x128xf32>
    %76 = arith.addf %68, %72 : vector<8x128xf32>
    %cst_43 = arith.constant dense<0.000000e+00> : vector<128xf32>
    %77 = vector.multi_reduction <add>, %76, %cst_43 [0] : vector<8x128xf32> to vector<128xf32>
    %78 = vector.shape_cast %77 : vector<128xf32> to vector<1x128xf32>
    %c2_44 = arith.constant 2 : index
    %c0_45 = arith.constant 0 : index
    %79 = vector.load %arg5[%c2_44, %c0_45] : memref<3x128xf32, #tpu.memory_space<vmem>>, vector<1x128xf32>
    %80 = arith.addf %79, %75 : vector<1x128xf32>
    %c2_46 = arith.constant 2 : index
    %c0_47 = arith.constant 0 : index
    %81 = vector.load %arg5[%c2_46, %c0_47] : memref<3x128xf32, #tpu.memory_space<vmem>>, vector<1x128xf32>
    tpu.vector_store %arg5[%c2_46, %c0_47], %80 {strides = array<i32>} : memref<3x128xf32, #tpu.memory_space<vmem>>, vector<1x128xf32>,
    %c2_48 = arith.constant 2 : index
    %c0_49 = arith.constant 0 : index
    %82 = vector.load %arg6[%c2_48, %c0_49] : memref<3x128xf32, #tpu.memory_space<vmem>>, vector<1x128xf32>
    %83 = arith.addf %82, %78 : vector<1x128xf32>
    %c2_50 = arith.constant 2 : index
    %c0_51 = arith.constant 0 : index
    %84 = vector.load %arg6[%c2_50, %c0_51] : memref<3x128xf32, #tpu.memory_space<vmem>>, vector<1x128xf32>
    tpu.vector_store %arg6[%c2_50, %c0_51], %83 {strides = array<i32>} : memref<3x128xf32, #tpu.memory_space<vmem>>, vector<1x128xf32>,
    %c0_i32_52 = arith.constant 0 : i32
    %85 = arith.cmpi eq, %arg1, %c0_i32_52 : i32
    %86 = arith.extui %85 : i1 to i32
    %c0_i32_53 = arith.constant 0 : i32
    %87 = arith.cmpi ne, %86, %c0_i32_53 : i32
    scf.if %87 {
      %c0_54 = arith.constant 0 : index
      %c0_55 = arith.constant 0 : index
      %88 = vector.load %arg5[%c0_54, %c0_55] : memref<3x128xf32, #tpu.memory_space<vmem>>, vector<3x128xf32>
      %cst_56 = arith.constant dense<0.000000e+00> : vector<3xf32>
      %89 = vector.multi_reduction <add>, %88, %cst_56 [1] : vector<3x128xf32> to vector<3xf32>
      %90 = vector.shape_cast %89 : vector<3xf32> to vector<3x1xf32>
      %c0_57 = arith.constant 0 : index
      %c0_58 = arith.constant 0 : index
      %91 = vector.load %arg6[%c0_57, %c0_58] : memref<3x128xf32, #tpu.memory_space<vmem>>, vector<3x128xf32>
      %cst_59 = arith.constant dense<0.000000e+00> : vector<3xf32>
      %92 = vector.multi_reduction <add>, %91, %cst_59 [1] : vector<3x128xf32> to vector<3xf32>
      %93 = vector.shape_cast %92 : vector<3xf32> to vector<3x1xf32>
      %94 = arith.subf %93, %90 : vector<3x1xf32>
      %cst_60 = arith.constant 9.99999993E-9 : f32
      %95 = vector.broadcast %cst_60 : f32 to vector<3x1xf32>
      %96 = arith.addf %90, %95 : vector<3x1xf32>
      %cst_61 = arith.constant 9.99999993E-9 : f32
      %97 = vector.broadcast %cst_61 : f32 to vector<3x1xf32>
      %98 = arith.addf %94, %97 : vector<3x1xf32>
      %99 = arith.divf %96, %98 : vector<3x1xf32>
      %c0_62 = arith.constant 0 : index
      %c0_63 = arith.constant 0 : index
      %c0_64 = arith.constant 0 : index
      %100 = vector.load %arg4[%c0_62, %c0_63, %c0_64] : memref<1x3x1xf32, #tpu.memory_space<vmem>>, vector<1x3x1xf32>
      %101 = vector.shape_cast %100 : vector<1x3x1xf32> to vector<3x1xf32>
      %102 = vector.shape_cast %99 : vector<3x1xf32> to vector<1x3x1xf32>
      tpu.vector_store %arg4[%c0_62, %c0_63, %c0_64], %102 {strides = array<i32>} : memref<1x3x1xf32, #tpu.memory_space<vmem>>, vector<1x3x1xf32>,
    } else {
    }
    return
  }
  func.func @transform_0(%arg0: i32, %arg1: i32) -> (i32, i32, i32, i32) {
    %c0_i32 = arith.constant 0 : i32
    %c0_i32_0 = arith.constant 0 : i32
    %c0_i32_1 = arith.constant 0 : i32
    return %arg0, %c0_i32, %arg1, %c0_i32_0 : i32, i32, i32, i32
  }
  func.func @transform_1(%arg0: i32, %arg1: i32) -> (i32, i32, i32) {
    %c0_i32 = arith.constant 0 : i32
    %c0_i32_0 = arith.constant 0 : i32
    return %arg0, %arg1, %c0_i32 : i32, i32, i32
  }
  func.func @transform_2(%arg0: i32, %arg1: i32) -> (i32, i32, i32) {
    %c0_i32 = arith.constant 0 : i32
    %c0_i32_0 = arith.constant 0 : i32
    %c0_i32_1 = arith.constant 0 : i32
    return %arg0, %c0_i32, %c0_i32_0 : i32, i32, i32
  }
}

</mosaic_0001>

<llo_original>
// kernel: tpu_custom_call.1
$region0: #{tpu_custom_call.1}
  #allocation0 [shape = 'u32[]', space=smem, size = 0x4, offset = 0x4, fixed_abs, tag = 'smem constant byte address 0x4 - core index']
  #allocation1 [shape = 'u32[72,128]{1,0:T(1,128)}', space=vmem, size = 0x9000, scoped, tag = 'internal scratch']
  #allocation2 [shape = 'f32[3,128]{1,0:T(4,128)}', space=vmem, size = 0x800, scoped, tag = 'scratch operand']
  #allocation3 [shape = 'f32[3,128]{1,0:T(4,128)}', space=vmem, size = 0x800, scoped, tag = 'scratch operand']
  %s0 = inlined_call_operand.hbm [shape: f32[2,4,8,128], index: 0, kind: input, shape index: {}]
  %s1 = inlined_call_operand.hbm [shape: s32[2,8,128], index: 1, kind: input, shape index: {}]
  %s2 = inlined_call_operand.vmem [shape: f32[2,3,1], index: 2, kind: output, shape index: {}]
  %s3 = sld [smem:[#allocation0]]
  $region57: #{tpu_custom_call.1} parent=0
    _
  %s5 = ssub.s32 1, %s3
  %s6 = scalar_select 0, %s5, %s3
  $region1: #{tpu_custom_call.1} parent=0
    #allocation4 [shape = 'u8[32768]{0}', space=vmem, size = 0x8000, scoped, tag = 'input window, operand 0']
    #allocation5 [shape = 's32[2]{0}', space=sflag, size = 0x8, scoped, tag = 'scoped memory for tpu_custom_call.1']
    #allocation6 [shape = 'u8[8192]{0}', space=vmem, size = 0x2000, scoped, tag = 'input window, operand 1']
    #allocation7 [shape = 's32[2]{0}', space=sflag, size = 0x8, scoped, tag = 'scoped memory for tpu_custom_call.1']
    %7 = vsyncpa [#allocation5], 0
    %s8 = scalar_lea.sflag [#allocation5], 1
    %9 = vsyncpa %s8, 0
    %10 = vsyncpa [#allocation7], 0
    %s11 = scalar_lea.sflag [#allocation7], 1
    %12 = vsyncpa %s11, 0
    loop: start=0, step=1, limit=4
    $region2: #{tpu_custom_call.1} parent=1 // loop_pre_header
      _
    $region3: #{tpu_custom_call.1} parent=1 // loop_header
      %s14 = sphi 0, %s18
      %p15 = scmp.ge.s32.totalorder %s14, 4
      %s21 = sphi 0, %s33
      %s22 = sphi 0, %s29
      %s23 = sphi 0, %s21
      %s24 = sphi 0, %s22
      %s25 = sphi 0, %s23
      %s26 = sphi 0, %s24
      %s38 = sphi 0, %s40
      %s41 = sphi 0, %s38
      %s42 = sphi 0, %s41
      %s58 = sphi 0, %s42
      %s66 = sphi 0, %s68
      %s69 = sphi 0, %s66
      %s70 = sphi 0, %s69
      %s86 = sphi 0, %s70
      %s92 = sphi 0, %s94
      %s95 = sphi 0, %s92
      %s96 = sphi 0, %s95
      %s112 = sphi 0, %s96
    $region4: #{tpu_custom_call.1} parent=1 // loop_header_branch
      %17 = sbr.rel (%p15) target = $region8
    $region5: #{tpu_custom_call.1} parent=1 // loop_body
      %s19 = ssub.s32 %s14, 1
      %s20 = ssub.s32 %s14, 2
      %s27 = sadd.s32 1, %s22
      %p28 = scmp.ge.s32.totalorder %s27, 1
      %s29 = scalar_select %p28, 0, %s27
      %s30 = sadd.s32 1, %s21
      %s31 = scalar_select %p28, %s30, %s21
      %p32 = scmp.ge.s32.totalorder %s31, 2
      %s33 = scalar_select %p32, 0, %s31
      %s34 = ssub.s32 %s21, %s33
      %s35 = ssub.s32 %s22, %s29
      %s36 = sor.u32 %s34, %s35
      %p37 = scmp.eq.s32.totalorder %s36, 0
      %s39 = sadd.s32 %s38, 1
      %s40 = scalar_select %p37, %s38, %s39
      %p43 = pneg %p37
      %p44 = scmp.eq.s32.totalorder %s14, 1
      %p45 = por %p43, %p44
      %p46 = scmp.ne.s32.totalorder %s38, %s41
      %p47 = scmp.eq.s32.totalorder %s14, 0
      %p48 = por %p46, %p47
      %p49 = scmp.ne.s32.totalorder %s38, %s41
      %p50 = scmp.eq.s32.totalorder %s19, 1
      %p51 = por %p49, %p50
      %p52 = scmp.ne.s32.totalorder %s41, %s42
      %p53 = scmp.eq.s32.totalorder %s19, 0
      %p54 = por %p52, %p53
      %p55 = scmp.ne.s32.totalorder %s41, %s42
      %p56 = scmp.eq.s32.totalorder %s20, 1
      %p57 = por %p55, %p56
      %p59 = scmp.ne.s32.totalorder %s42, %s58
      %p60 = scmp.eq.s32.totalorder %s20, 0
      %p61 = por %p59, %p60
      %s62 = ssub.s32 %s21, %s33
      %s63 = ssub.s32 %s22, %s29
      %s64 = sor.u32 %s62, %s63
      %p65 = scmp.eq.s32.totalorder %s64, 0
      %s67 = sadd.s32 %s66, 1
      %s68 = scalar_select %p65, %s66, %s67
      %p71 = pneg %p65
      %p72 = scmp.eq.s32.totalorder %s14, 1
      %p73 = por %p71, %p72
      %p74 = scmp.ne.s32.totalorder %s66, %s69
      %p75 = scmp.eq.s32.totalorder %s14, 0
      %p76 = por %p74, %p75
      %p77 = scmp.ne.s32.totalorder %s66, %s69
      %p78 = scmp.eq.s32.totalorder %s19, 1
      %p79 = por %p77, %p78
      %p80 = scmp.ne.s32.totalorder %s69, %s70
      %p81 = scmp.eq.s32.totalorder %s19, 0
      %p82 = por %p80, %p81
      %p83 = scmp.ne.s32.totalorder %s69, %s70
      %p84 = scmp.eq.s32.totalorder %s20, 1
      %p85 = por %p83, %p84
      %p87 = scmp.ne.s32.totalorder %s70, %s86
      %p88 = scmp.eq.s32.totalorder %s20, 0
      %p89 = por %p87, %p88
      %s90 = ssub.s32 %s21, %s33
      %p91 = scmp.eq.s32.totalorder %s90, 0
      %s93 = sadd.s32 %s92, 1
      %s94 = scalar_select %p91, %s92, %s93
      %p97 = pneg %p91
      %p98 = scmp.eq.s32.totalorder %s14, 1
      %p99 = por %p97, %p98
      %p100 = scmp.ne.s32.totalorder %s92, %s95
      %p101 = scmp.eq.s32.totalorder %s14, 0
      %p102 = por %p100, %p101
      %p103 = scmp.ne.s32.totalorder %s92, %s95
      %p104 = scmp.eq.s32.totalorder %s19, 1
      %p105 = por %p103, %p104
      %p106 = scmp.ne.s32.totalorder %s95, %s96
      %p107 = scmp.eq.s32.totalorder %s19, 0
      %p108 = por %p106, %p107
      %p109 = scmp.ne.s32.totalorder %s95, %s96
      %p110 = scmp.eq.s32.totalorder %s20, 1
      %p111 = por %p109, %p110
      %p113 = scmp.ne.s32.totalorder %s96, %s112
      %p114 = scmp.eq.s32.totalorder %s20, 0
      %p115 = por %p113, %p114
      %p116 = scmp.le.s32.totalorder 1, %s14
      %p117 = scmp.lt.s32.totalorder %s14, 3
      %p118 = pnand %p116, %p117
      %p119 = pneg %p118
      // Predicated region
      $region9: #{tpu_custom_call.1} parent=5 // pred_check
        _
      $region10: #{tpu_custom_call.1} parent=5 // pred_check_branch
        %121 = sbr.rel (%p118) target = $region12
      $region11: #{tpu_custom_call.1} parent=5 // pred_region
        %s122 = ssub.s32 %s14, 1
      $region12: #{tpu_custom_call.1} parent=5 // pred_fallthru
        _
      %p123 = scmp.lt.s32.totalorder %s14, 2
      // Predicated region
      $region13: #{tpu_custom_call.1} parent=5 // pred_check
        %p124 = pneg %p123
      $region14: #{tpu_custom_call.1} parent=5 // pred_check_branch
        %126 = sbr.rel (%p124) target = $region16
      $region15: #{tpu_custom_call.1} parent=5 // pred_region
        // Predicated region
        $region17: #{tpu_custom_call.1} parent=15 // pred_check
          %p127 = pneg %p48
        $region18: #{tpu_custom_call.1} parent=15 // pred_check_branch
          %129 = sbr.rel (%p127) target = $region20
        $region19: #{tpu_custom_call.1} parent=15 // pred_region
          %s130 = sand.u32 %s38, 1
          %s131 = scalar_lea.sflag [#allocation5], %s130
          %s132 = sand.u32 %s38, 1
          %s133 = smul.addr %s132, 32
          %s134 = scalar_lea.vmem [#allocation4], %s133
          %136 = vsyncadd %s131, 0
          %s137 = smul.addr %s21, 4
          %s138 = sadd.s32 %s22, %s137
          %s139 = smul.addr %s138, 8
          %s140 = scalar_lea.hbm %s0, %s139
          %s141 = sshll.u32 %s140, 4
          %s142 = int_to_ptr.hbm [resolvable:$true] %s141
          %s143 = sshll.u32 %s134, 4
          %s144 = int_to_ptr.vmem [resolvable:$true] %s143
          %149 = dma.hbm_to_vmem [thread:$0]  %s142, 512, %s144, %s131, 128, 128, 8
        $region20: #{tpu_custom_call.1} parent=15 // pred_fallthru
          _
        // Predicated region
        $region21: #{tpu_custom_call.1} parent=15 // pred_check
          %p150 = pneg %p76
        $region22: #{tpu_custom_call.1} parent=15 // pred_check_branch
          %152 = sbr.rel (%p150) target = $region24
        $region23: #{tpu_custom_call.1} parent=15 // pred_region
          %s153 = sand.u32 %s66, 1
          %s154 = scalar_lea.sflag [#allocation7], %s153
          %s155 = sand.u32 %s66, 1
          %s156 = smul.addr %s155, 8
          %s157 = scalar_lea.vmem [#allocation6], %s156
          %159 = vsyncadd %s154, 0
          %s160 = sadd.s32 %s22, %s21
          %s161 = smul.addr %s160, 8
          %s162 = scalar_lea.hbm %s1, %s161
          %s164 = sshll.u32 %s162, 4
          %s165 = int_to_ptr.hbm [resolvable:$true] %s164
          %s166 = sshll.u32 %s157, 4
          %s167 = int_to_ptr.vmem [resolvable:$true] %s166
          %169 = dma.hbm_to_vmem [thread:$0]  %s165, 128, %s167, %s154
        $region24: #{tpu_custom_call.1} parent=15 // pred_fallthru
          _
      $region16: #{tpu_custom_call.1} parent=5 // pred_fallthru
        _
      %p170 = scmp.le.s32.totalorder 1, %s14
      %p171 = scmp.lt.s32.totalorder %s14, 3
      %p172 = pnand %p170, %p171
      %p173 = pneg %p172
      // Predicated region
      $region25: #{tpu_custom_call.1} parent=5 // pred_check
        _
      $region26: #{tpu_custom_call.1} parent=5 // pred_check_branch
        %175 = sbr.rel (%p172) target = $region28
      $region27: #{tpu_custom_call.1} parent=5 // pred_region
        %s176 = ssub.s32 %s14, 1
        %s177 = sand.u32 %s41, 1
        %s178 = scalar_lea.sflag [#allocation5], %s177
        %s179 = sand.u32 %s41, 1
        %s180 = smul.addr %s179, 32
        %s181 = scalar_lea.vmem [#allocation4], %s180
        // Predicated region
        $region29: #{tpu_custom_call.1} parent=27 // pred_check
          %p182 = pneg %p54
        $region30: #{tpu_custom_call.1} parent=27 // pred_check_branch
          %184 = sbr.rel (%p182) target = $region32
        $region31: #{tpu_custom_call.1} parent=27 // pred_region
          %186 = dma.done %s178, 512
        $region32: #{tpu_custom_call.1} parent=27 // pred_fallthru
          _
        %s187 = sand.u32 %s69, 1
        %s188 = scalar_lea.sflag [#allocation7], %s187
        %s189 = sand.u32 %s69, 1
        %s190 = smul.addr %s189, 8
        %s191 = scalar_lea.vmem [#allocation6], %s190
        // Predicated region
        $region33: #{tpu_custom_call.1} parent=27 // pred_check
          %p192 = pneg %p82
        $region34: #{tpu_custom_call.1} parent=27 // pred_check_branch
          %194 = sbr.rel (%p192) target = $region36
        $region35: #{tpu_custom_call.1} parent=27 // pred_region
          %196 = dma.done %s188, 128
        $region36: #{tpu_custom_call.1} parent=27 // pred_fallthru
          _
        %s197 = sand.u32 %s41, 1
        %s198 = scalar_lea.sflag [#allocation5], %s197
        %s199 = sand.u32 %s41, 1
        %s200 = smul.addr %s199, 32
        %s201 = scalar_lea.vmem [#allocation4], %s200
        %p202 = pneg %p54
        %p203 = pneg %p51
        %s204 = sand.u32 %s69, 1
        %s205 = scalar_lea.sflag [#allocation7], %s204
        %s206 = sand.u32 %s69, 1
        %s207 = smul.addr %s206, 8
        %s208 = scalar_lea.vmem [#allocation6], %s207
        %p209 = pneg %p82
        %p210 = pneg %p79
        %p211 = pneg %p108
        %p212 = pneg %p105
        %p213 = scmp.lt.s32.totalorder %s23, 1
        %s214 = scalar_select %p213, %s23, 1
        %s215 = smul.addr %s214, 4
        %s216 = scalar_lea.vmem %s2, %s215
        %p217 = scmp.lt.s32.totalorder %s23, 1
        %s218 = scalar_select %p217, %s23, 1
        %s219 = smul.addr %s218, 4
        %s220 = scalar_lea.vmem %s2, %s219
        %p221 = scmp.eq.s32.totalorder %s24, 0
        // Predicated region
        $region37: #{tpu_custom_call.1} parent=27 // pred_check
          %p222 = pneg %p221
        $region38: #{tpu_custom_call.1} parent=27 // pred_check_branch
          %224 = sbr.rel (%p222) target = $region40
        $region39: #{tpu_custom_call.1} parent=27 // pred_region
          %225 = vst [vmem:[#allocation2] sm:$0x7] 0.0
          %226 = vst [vmem:[#allocation3] sm:$0x7] 0.0
        $region40: #{tpu_custom_call.1} parent=27 // pred_fallthru
          _
        %v227 = vld [vmem:[%s191] sm:$0xff]
        %v228 = vld [vmem:[%s181] sm:$0xff]
        %s229 = scalar_lea.vmem %s181, 8 [#allocation4]
        %v230 = vld [vmem:[%s229] sm:$0xff]
        %vm231 = vcmp.gt.f32.partialorder %v230, %v228
        %v232 = vsel %vm231, %v230, %v228
        %v233 = vsel %vm231, 1, 0
        %s234 = scalar_lea.vmem %s181, 16 [#allocation4]
        %v235 = vld [vmem:[%s234] sm:$0xff]
        %vm236 = vcmp.gt.f32.partialorder %v235, %v232
        %v237 = vsel %vm236, %v235, %v232
        %v238 = vsel %vm236, 2, %v233
        %s239 = scalar_lea.vmem %s181, 24 [#allocation4]
        %v240 = vld [vmem:[%s239] sm:$0xff]
        %vm241 = vcmp.gt.f32.partialorder %v240, %v237
        %v242 = vsel %vm241, 3, %v238
        %vm243 = vcmp.eq.s32.totalorder %v227, 1
        %v244 = vsel %vm243, 1, 0
        %v245 = vcvt.s32.f32 %v244
        %vm246 = vcmp.eq.s32.totalorder %v242, 1
        %v247 = vsel %vm246, 1, 0
        %v248 = vcvt.s32.f32 %v247
        %v249 = vmul.f32 %v245, %v248
        %v250 = vrot.slane %v249, 4
        %v251 = vadd.f32 %v249, %v250
        %v252 = vrot.slane %v251, 2
        %v253 = vadd.f32 %v251, %v252
        %v254 = vrot.slane %v253, 1
        %v255 = vadd.f32 %v253, %v254
        %v256 = vadd.f32 %v245, %v248
        %v257 = vrot.slane %v256, 4
        %v258 = vadd.f32 %v256, %v257
        %v259 = vrot.slane %v258, 2
        %v260 = vadd.f32 %v258, %v259
        %v261 = vrot.slane %v260, 1
        %v262 = vadd.f32 %v260, %v261
        %v263 = vld [vmem:[#allocation2] sm:$0x1]
        %v264 = vadd.f32 %v263, %v255
        %265 = vst [vmem:[#allocation2] sm:$0x1] %v264
        %v266 = vld [vmem:[#allocation3] sm:$0x1]
        %v267 = vadd.f32 %v266, %v262
        %268 = vst [vmem:[#allocation3] sm:$0x1] %v267
        %vm269 = vcmp.eq.s32.totalorder %v227, 2
        %v270 = vsel %vm269, 1, 0
        %v271 = vcvt.s32.f32 %v270
        %vm272 = vcmp.eq.s32.totalorder %v242, 2
        %v273 = vsel %vm272, 1, 0
        %v274 = vcvt.s32.f32 %v273
        %v275 = vmul.f32 %v271, %v274
        %v276 = vrot.slane %v275, 4
        %v277 = vadd.f32 %v275, %v276
        %v278 = vrot.slane %v277, 2
        %v279 = vadd.f32 %v277, %v278
        %v280 = vrot.slane %v279, 1
        %v281 = vadd.f32 %v279, %v280
        %v282 = vadd.f32 %v271, %v274
        %v283 = vrot.slane %v282, 4
        %v284 = vadd.f32 %v282, %v283
        %v285 = vrot.slane %v284, 2
        %v286 = vadd.f32 %v284, %v285
        %v287 = vrot.slane %v286, 1
        %v288 = vadd.f32 %v286, %v287
        %v289 = vld [vmem:[#allocation2 + $0x1] sm:$0x1]
        %v290 = vadd.f32 %v289, %v281
        %291 = vst [vmem:[#allocation2 + $0x1] sm:$0x1] %v290
        %v292 = vld [vmem:[#allocation3 + $0x1] sm:$0x1]
        %v293 = vadd.f32 %v292, %v288
        %294 = vst [vmem:[#allocation3 + $0x1] sm:$0x1] %v293
        %vm295 = vcmp.eq.s32.totalorder %v227, 3
        %v296 = vsel %vm295, 1, 0
        %v297 = vcvt.s32.f32 %v296
        %vm298 = vcmp.eq.s32.totalorder %v242, 3
        %v299 = vsel %vm298, 1, 0
        %v300 = vcvt.s32.f32 %v299
        %v301 = vmul.f32 %v297, %v300
        %v302 = vrot.slane %v301, 4
        %v303 = vadd.f32 %v301, %v302
        %v304 = vrot.slane %v303, 2
        %v305 = vadd.f32 %v303, %v304
        %v306 = vrot.slane %v305, 1
        %v307 = vadd.f32 %v305, %v306
        %v308 = vadd.f32 %v297, %v300
        %v309 = vrot.slane %v308, 4
        %v310 = vadd.f32 %v308, %v309
        %v311 = vrot.slane %v310, 2
        %v312 = vadd.f32 %v310, %v311
        %v313 = vrot.slane %v312, 1
        %v314 = vadd.f32 %v312, %v313
        %v315 = vld [vmem:[#allocation2 + $0x2] sm:$0x1]
        %v316 = vadd.f32 %v315, %v307
        %317 = vst [vmem:[#allocation2 + $0x2] sm:$0x1] %v316
        %v318 = vld [vmem:[#allocation3 + $0x2] sm:$0x1]
        %v319 = vadd.f32 %v318, %v314
        %320 = vst [vmem:[#allocation3 + $0x2] sm:$0x1] %v319
        // Predicated region
        $region41: #{tpu_custom_call.1} parent=27 // pred_check
          %p321 = pneg %p221
        $region42: #{tpu_custom_call.1} parent=27 // pred_check_branch
          %323 = sbr.rel (%p321) target = $region44
        $region43: #{tpu_custom_call.1} parent=27 // pred_region
          %v324 = vld [vmem:[#allocation2] sm:$0x7]
          %vm325 = vcmask 1042432
          %v326 = vsel %vm325, %v324, 0.0
          %327 = vadd.xlane.f32.xlu0 %v326
          %v328 = vpop.xlane.xlu0 %327
          %v329 = vld [vmem:[#allocation3] sm:$0x7]
          %v330 = vsel %vm325, %v329, 0.0
          %331 = vadd.xlane.f32.xlu0 %v330
          %v332 = vpop.xlane.xlu0 %331
          %v333 = vsub.f32 %v332, %v328
          %v334 = vadd.f32 %v328, 1e-08
          %v335 = vadd.f32 %v333, 1e-08
          %v336 = vrcp.pop %v335
          %v337 = vmul.f32 %v335, %v336
          %v338 = vsub.f32 1.0, %v337
          %v339 = vmul.f32 %v336, %v338
          %v340 = vadd.f32 %v336, %v339
          %vm341 = vweird.f32 %v335
          %vm342 = vweird.f32 %v336
          %vm343 = vmor %vm341, %vm342
          %v344 = vsel %vm343, %v336, %v340
          %v345 = vand.u32 2147483647, %v335
          %vm346 = vcmp.eq.f32.partialorder %v345, 8.507059e+37
          %v347 = vand.u32 %v335, 2147483648
          %v348 = vor.u32 1.1754944e-38, %v347
          %v349 = vsel %vm346, %v348, %v344
          %v350 = vmul.f32 %v334, %v349
          %vm351 = vcmask 2048
          %352 = vst.msk [vmem:[%s220] sm:$0x7] %vm351, %v350
        $region44: #{tpu_custom_call.1} parent=27 // pred_fallthru
          _
        %p353 = scmp.lt.s32.totalorder %s23, 1
        %s354 = scalar_select %p353, %s23, 1
        %s355 = smul.addr %s354, 4
        %s356 = scalar_lea.vmem %s2, %s355
        // Predicated region
        $region45: #{tpu_custom_call.1} parent=27 // pred_check
          %p357 = pneg %p105
        $region46: #{tpu_custom_call.1} parent=27 // pred_check_branch
          %359 = sbr.rel (%p357) target = $region48
        $region47: #{tpu_custom_call.1} parent=27 // pred_region
          _
        $region48: #{tpu_custom_call.1} parent=27 // pred_fallthru
          _
      $region28: #{tpu_custom_call.1} parent=5 // pred_fallthru
        _
      %p360 = scmp.le.s32.totalorder 2, %s14
      // Predicated region
      $region49: #{tpu_custom_call.1} parent=5 // pred_check
        %p361 = pneg %p360
      $region50: #{tpu_custom_call.1} parent=5 // pred_check_branch
        %363 = sbr.rel (%p361) target = $region52
      $region51: #{tpu_custom_call.1} parent=5 // pred_region
        %s364 = ssub.s32 %s14, 2
        // Predicated region
        $region53: #{tpu_custom_call.1} parent=51 // pred_check
          %p365 = pneg %p111
        $region54: #{tpu_custom_call.1} parent=51 // pred_check_branch
          %367 = sbr.rel (%p365) target = $region56
        $region55: #{tpu_custom_call.1} parent=51 // pred_region
          %p368 = scmp.lt.s32.totalorder %s25, 1
          %s369 = scalar_select %p368, %s25, 1
          %s370 = smul.addr %s369, 4
          %s371 = scalar_lea.vmem %s2, %s370
        $region56: #{tpu_custom_call.1} parent=51 // pred_fallthru
          _
      $region52: #{tpu_custom_call.1} parent=5 // pred_fallthru
        _
    $region6: #{tpu_custom_call.1} parent=1 // loop_footer
      %s18 = sadd.s32 1, %s14
    $region7: #{tpu_custom_call.1} parent=1 // loop_footer_branch
      %13 = sbr.rel target = $region3
    $region8: #{tpu_custom_call.1} parent=1 // loop_exit
      _
    %372 = vsyncpa [#allocation5], 1
    %s373 = scalar_lea.sflag [#allocation5], 1
    %374 = vsyncpa %s373, 1
    %375 = vsyncpa [#allocation7], 1
    %s376 = scalar_lea.sflag [#allocation7], 1
    %377 = vsyncpa %s376, 1

</llo_original>
